<compile_context>
chip_gen: v5e
topology: v5e:2x2
jax: 0.10.0
libtpu: 0.0.40
codegen_flags: <defaults>
</compile_context>

<pallas_src>
import functools
import math

import jax
import jax.numpy as jnp
from jax.experimental import pallas as pl
from jax.experimental.pallas import tpu as pltpu

D_MODEL = 9
EPS = 1e-5

# Pipeline VMEM budget for the tiled activation buffers (in + out, double
# buffered).  Chosen against v7x's 64 MiB/TC VMEM with headroom for Mosaic
# scratch; trivially fits v5e/v6e's 128 MiB.
_PIPELINE_VMEM_BUDGET = 40 * 1024 * 1024


def _rmsnorm_packed_kernel(x_ref, w_ref, r_ref, e_ref, o_ref, *, eps, inv_d):
    # x_ref: (tm, W)  -- each row packs P logical rows of d_model features.
    # w_ref: (1, W)   -- weight tiled P times.
    # r_ref: (W, P)   -- 0/1 segment-reduce matrix.
    # e_ref: (P, W)   -- 0/1 segment-expand matrix.
    x = x_ref[...].astype(jnp.float32)
    w = w_ref[...].astype(jnp.float32)
    # Segmented sum of squares over each packed segment's d_model lanes.
    # Tiny MXU matmul (free slot here); HIGHEST keeps f32 accuracy.
    sq = jnp.dot(x * x, r_ref[...],
                 precision=jax.lax.Precision.HIGHEST,
                 preferred_element_type=jnp.float32)             # (tm, P)
    inv = jax.lax.rsqrt(sq * inv_d + eps)                        # EUP rsqrt
    inv_full = jnp.dot(inv, e_ref[...],
                       precision=jax.lax.Precision.HIGHEST,
                       preferred_element_type=jnp.float32)       # (tm, W)
    o_ref[...] = (x * inv_full * w).astype(o_ref.dtype)


def _pack_factor(rows: int, d: int) -> int:
    """Largest P >= 1 with P*d <= 128 and P | rows."""
    max_p = max(1, 128 // d)
    for p in range(min(max_p, rows), 0, -1):
        if rows % p == 0:
            return p
    return 1


def _choose_row_tile(packed_rows: int, max_tile_rows: int, itemsize: int) -> int:
    # Lane-padded VMEM bytes per packed row; 4 buffers (in + out, double-buffered).
    bytes_per_row = 128 * itemsize
    vmem_cap = max(8, _PIPELINE_VMEM_BUDGET // (4 * bytes_per_row))
    # Keep >= 2 grid steps when there is enough work (v7x megacore sharding).
    two_step = max(8, -(-packed_rows // 2))
    tm = min(max_tile_rows, vmem_cap, two_step)
    return max(8, (tm // 8) * 8)


def _rmsnorm_xla(x, weight, eps):
    xf = x.astype(jnp.float32)
    inv = jax.lax.rsqrt(jnp.mean(xf * xf, axis=-1, keepdims=True) + eps)
    return (xf * inv * weight.astype(jnp.float32)).astype(x.dtype)


def rmsnorm(x: jax.Array, weight: jax.Array, eps: float = EPS,
            *, max_tile_rows: int = 16384,
            min_rows_for_pallas: int = 1024) -> jax.Array:
    """RMSNorm over the last axis. x: (..., d_model), weight: (d_model,)."""
    orig_shape = x.shape
    d = orig_shape[-1]
    assert weight.shape == (d,)
    rows = math.prod(orig_shape[:-1])

    if rows < min_rows_for_pallas or d > 128:
        # Tiny activations: a pallas_call is pure launch overhead -> let XLA
        # fuse the plain VPU expression into neighbors.
        # TODO(synk): add a lane-tiled (non-packed) kernel path for d_model > 128.
        return _rmsnorm_xla(x, weight, eps)

    p = _pack_factor(rows, d)
    w_lanes = p * d
    packed_rows = rows // p
    x2 = x.reshape(packed_rows, w_lanes)      # contiguous -> free reshape

    tm = _choose_row_tile(packed_rows, max_tile_rows, x.dtype.itemsize)
    grid = (pl.cdiv(packed_rows, tm),)        # remainder block masked by Pallas

    # Resident constants: tiled weight + 0/1 segment reduce/expand matrices.
    seg_of_lane = jnp.arange(w_lanes, dtype=jnp.int32) // d            # (W,)
    expand_mat = (jnp.arange(p, dtype=jnp.int32)[:, None]
                  == seg_of_lane[None, :]).astype(jnp.float32)         # (P, W)
    reduce_mat = expand_mat.T                                          # (W, P)
    w_tiled = jnp.tile(weight, p).reshape(1, w_lanes)

    tile_bytes = tm * 128 * x.dtype.itemsize
    vmem_limit = int(min(56 * 1024 * 1024,
                         max(16 * 1024 * 1024, 4 * tile_bytes + (2 << 20))))

    cost = pl.CostEstimate(
        flops=3 * rows * d + packed_rows * 4 * w_lanes * p,
        transcendentals=rows,
        bytes_accessed=2 * rows * d * x.dtype.itemsize,
    )

    out = pl.pallas_call(
        functools.partial(_rmsnorm_packed_kernel, eps=eps, inv_d=1.0 / d),
        out_shape=jax.ShapeDtypeStruct((packed_rows, w_lanes), x.dtype),
        grid_spec=pltpu.PrefetchScalarGridSpec(
            num_scalar_prefetch=0,
            grid=grid,
            in_specs=[
                pl.BlockSpec((tm, w_lanes), lambda i: (i, 0)),
                pl.BlockSpec((1, w_lanes), lambda i: (0, 0)),     # resident weight
                pl.BlockSpec((w_lanes, p), lambda i: (0, 0)),     # resident reduce
                pl.BlockSpec((p, w_lanes), lambda i: (0, 0)),     # resident expand
            ],
            out_specs=pl.BlockSpec((tm, w_lanes), lambda i: (i, 0)),
        ),
        compiler_params=pltpu.CompilerParams(
            dimension_semantics=("parallel",),   # rows shard across v7x TCs
            vmem_limit_bytes=vmem_limit,
        ),
        cost_estimate=cost,
    )(x2, w_tiled, reduce_mat, expand_mat)

    return out.reshape(orig_shape)


if __name__ == "__main__":
    key = jax.random.PRNGKey(0)
    k1, k2, k3 = jax.random.split(key, 3)

    # Module init: nn.Parameter(torch.ones(d_model))
    weight_ones = jnp.ones((D_MODEL,), dtype=jnp.float32)
    # Non-trivial weight to also verify the tiled-weight indexing.
    weight_ramp = 0.5 + jnp.arange(D_MODEL, dtype=jnp.float32) / 10.0

    def check(y, x, w):
        ref = _rmsnorm_xla(x, w, EPS)
        assert jnp.allclose(y, ref, atol=1e-5, rtol=1e-5), \
            float(jnp.max(jnp.abs(y - ref)))

    # 1) Module-sized input (batch=2, seq=8, d_model=9), forced through the
    #    Pallas kernel: rows=16 -> pack factor 8 -> packed view (2, 72).
    x1 = jax.random.normal(k1, (2, 8, D_MODEL), dtype=jnp.float32)
    y1 = jax.block_until_ready(rmsnorm(x1, weight_ones, EPS, min_rows_for_pallas=0))
    check(y1, x1, weight_ones)

    # 2) rows=126 -> pack factor 14 (126/128 lanes), multi-step grid with a
    #    masked remainder block (packed_rows=9, tm=8, grid=2) + ramp weight.
    x2 = jax.random.normal(k2, (2, 63, D_MODEL), dtype=jnp.float32)
    y2 = jax.block_until_ready(rmsnorm(x2, weight_ramp, EPS, min_rows_for_pallas=0))
    check(y2, x2, weight_ramp)

    # 3) Default dispatch at tiny size takes the fused-XLA path (per review).
    x3 = jax.random.normal(k3, (2, 8, D_MODEL), dtype=jnp.float32)
    y3 = jax.block_until_ready(rmsnorm(x3, weight_ones, EPS))
    check(y3, x3, weight_ones)

    print("KERNEL_OK")
</pallas_src>

<mosaic_0001>
module attributes {stable_mosaic.version = 11 : i64} {
  func.func @_rmsnorm_packed_kernel(%arg0: i32, %arg1: memref<8x72xf32, #tpu.memory_space<vmem>>, %arg2: memref<1x72xf32, #tpu.memory_space<vmem>>, %arg3: memref<72x8xf32, #tpu.memory_space<vmem>>, %arg4: memref<8x72xf32, #tpu.memory_space<vmem>>, %arg5: memref<8x72xf32, #tpu.memory_space<vmem>>) attributes {dimension_semantics = [#tpu.dimension_semantics<parallel>], iteration_bounds = array<i64: 1>, scalar_prefetch = 0 : i64, scratch_operands = 0 : i64, tpu.core_type = #tpu.core_type<tc>, window_params = [{transform_indices = @transform_0, window_bounds = array<i64: 8, 72>}, {pipeline_mode = #tpu.pipeline_mode<synchronous>, transform_indices = @transform_1, window_bounds = array<i64: 1, 72>}, {pipeline_mode = #tpu.pipeline_mode<synchronous>, transform_indices = @transform_2, window_bounds = array<i64: 72, 8>}, {pipeline_mode = #tpu.pipeline_mode<synchronous>, transform_indices = @transform_3, window_bounds = array<i64: 8, 72>}, {transform_indices = @transform_4, window_bounds = array<i64: 8, 72>}]} {
    %c0 = arith.constant 0 : index
    %c0_0 = arith.constant 0 : index
    %0 = vector.load %arg1[%c0, %c0_0] : memref<8x72xf32, #tpu.memory_space<vmem>>, vector<8x72xf32>
    %c0_1 = arith.constant 0 : index
    %c0_2 = arith.constant 0 : index
    %1 = vector.load %arg2[%c0_1, %c0_2] : memref<1x72xf32, #tpu.memory_space<vmem>>, vector<1x72xf32>
    %2 = arith.mulf %0, %0 : vector<8x72xf32>
    %c0_3 = arith.constant 0 : index
    %c0_4 = arith.constant 0 : index
    %3 = vector.load %arg3[%c0_3, %c0_4] : memref<72x8xf32, #tpu.memory_space<vmem>>, vector<72x8xf32>
    %cst = arith.constant dense<0.000000e+00> : vector<8x8xf32>
    %4 = tpu.matmul %2, %3, %cst {dimension_numbers = #tpu.dot_dimension_numbers<[1], [0], [0], [1], [0, 0, 1, 1], [], []>, precision = #tpu.contract_precision<fp32>} : vector<8x72xf32>, vector<72x8xf32>, vector<8x8xf32> -> vector<8x8xf32>
    %cst_5 = arith.constant 0.111111112 : f32
    %5 = vector.broadcast %cst_5 : f32 to vector<8x8xf32>
    %6 = arith.mulf %4, %5 : vector<8x8xf32>
    %cst_6 = arith.constant 9.99999974E-6 : f32
    %7 = vector.broadcast %cst_6 : f32 to vector<8x8xf32>
    %8 = arith.addf %6, %7 : vector<8x8xf32>
    %9 = math.rsqrt %8 : vector<8x8xf32>
    %c0_7 = arith.constant 0 : index
    %c0_8 = arith.constant 0 : index
    %10 = vector.load %arg4[%c0_7, %c0_8] : memref<8x72xf32, #tpu.memory_space<vmem>>, vector<8x72xf32>
    %cst_9 = arith.constant dense<0.000000e+00> : vector<8x72xf32>
    %11 = tpu.matmul %9, %10, %cst_9 {dimension_numbers = #tpu.dot_dimension_numbers<[1], [0], [0], [1], [0, 0, 1, 1], [], []>, precision = #tpu.contract_precision<fp32>} : vector<8x8xf32>, vector<8x72xf32>, vector<8x72xf32> -> vector<8x72xf32>
    %12 = arith.mulf %0, %11 : vector<8x72xf32>
    %13 = vector.broadcast %1 : vector<1x72xf32> to vector<8x72xf32>
    %14 = arith.mulf %12, %13 : vector<8x72xf32>
    %c0_10 = arith.constant 0 : index
    %c0_11 = arith.constant 0 : index
    %15 = vector.load %arg5[%c0_10, %c0_11] : memref<8x72xf32, #tpu.memory_space<vmem>>, vector<8x72xf32>
    tpu.vector_store %arg5[%c0_10, %c0_11], %14 {strides = array<i32>} : memref<8x72xf32, #tpu.memory_space<vmem>>, vector<8x72xf32>,
    return
  }
  func.func @transform_0(%arg0: i32) -> (i32, i32) {
    %c0_i32 = arith.constant 0 : i32
    %c0_i32_0 = arith.constant 0 : i32
    return %arg0, %c0_i32 : i32, i32
  }
  func.func @transform_1(%arg0: i32) -> (i32, i32) {
    %c0_i32 = arith.constant 0 : i32
    %c0_i32_0 = arith.constant 0 : i32
    %c0_i32_1 = arith.constant 0 : i32
    return %c0_i32, %c0_i32_0 : i32, i32
  }
  func.func @transform_2(%arg0: i32) -> (i32, i32) {
    %c0_i32 = arith.constant 0 : i32
    %c0_i32_0 = arith.constant 0 : i32
    %c0_i32_1 = arith.constant 0 : i32
    return %c0_i32, %c0_i32_0 : i32, i32
  }
  func.func @transform_3(%arg0: i32) -> (i32, i32) {
    %c0_i32 = arith.constant 0 : i32
    %c0_i32_0 = arith.constant 0 : i32
    %c0_i32_1 = arith.constant 0 : i32
    return %c0_i32, %c0_i32_0 : i32, i32
  }
  func.func @transform_4(%arg0: i32) -> (i32, i32) {
    %c0_i32 = arith.constant 0 : i32
    %c0_i32_0 = arith.constant 0 : i32
    return %arg0, %c0_i32 : i32, i32
  }
}

</mosaic_0001>

<llo_original>
// kernel: tpu_custom_call.1
$region0: #{tpu_custom_call.1}
  #allocation0 [shape = 'u32[]', space=smem, size = 0x4, offset = 0x4, fixed_abs, tag = 'smem constant byte address 0x4 - core index']
  #allocation1 [shape = 'u32[72,128]{1,0:T(1,128)}', space=vmem, size = 0x9000, scoped, tag = 'internal scratch']
  %s0 = inlined_call_operand.vmem [shape: f32[2,72], index: 0, kind: input, shape index: {}]
  %s1 = inlined_call_operand.vmem [shape: f32[1,72], index: 1, kind: input, shape index: {}]
  %s2 = inlined_call_operand.vmem [shape: f32[72,8], index: 2, kind: input, shape index: {}]
  %s3 = inlined_call_operand.vmem [shape: f32[8,72], index: 3, kind: input, shape index: {}]
  %s4 = inlined_call_operand.hbm [shape: f32[2,72], index: 4, kind: output, shape index: {}]
  %s5 = sld [smem:[#allocation0]]
  $region26: #{tpu_custom_call.1} parent=0
    _
  %s7 = ssub.s32 1, %s5
  %s8 = scalar_select 0, %s7, %s5
  $region1: #{tpu_custom_call.1} parent=0
    #allocation2 [shape = 'u8[4096]{0}', space=vmem, size = 0x1000, scoped, tag = 'output window, operand 0, single buffered']
    #allocation3 [shape = 's32[1]{0}', space=sflag, size = 0x4, scoped, tag = 'scoped memory for tpu_custom_call.1']
    %9 = vsyncpa [#allocation3], 0
    // Predicated region
    $region2: #{tpu_custom_call.1} parent=1 // pred_check
      _
    $region3: #{tpu_custom_call.1} parent=1 // pred_check_branch
      %11 = sbr.rel (0) target = $region5
    $region4: #{tpu_custom_call.1} parent=1 // pred_region
      _
    $region5: #{tpu_custom_call.1} parent=1 // pred_fallthru
      _
    // Predicated region
    $region6: #{tpu_custom_call.1} parent=1 // pred_check
      _
    $region7: #{tpu_custom_call.1} parent=1 // pred_check_branch
      %13 = sbr.rel (0) target = $region9
    $region8: #{tpu_custom_call.1} parent=1 // pred_region
      _
    $region9: #{tpu_custom_call.1} parent=1 // pred_fallthru
      _
    // Predicated region
    $region10: #{tpu_custom_call.1} parent=1 // pred_check
      _
    $region11: #{tpu_custom_call.1} parent=1 // pred_check_branch
      %15 = sbr.rel (0) target = $region13
    $region12: #{tpu_custom_call.1} parent=1 // pred_region
      _
    $region13: #{tpu_custom_call.1} parent=1 // pred_fallthru
      _
    // Predicated region
    $region14: #{tpu_custom_call.1} parent=1 // pred_check
      _
    $region15: #{tpu_custom_call.1} parent=1 // pred_check_branch
      %17 = sbr.rel (0) target = $region17
    $region16: #{tpu_custom_call.1} parent=1 // pred_region
      _
    $region17: #{tpu_custom_call.1} parent=1 // pred_fallthru
      _
    %v18 = vld [vmem:[%s0] sm:$0xff]
    %v19 = vld [vmem:[%s1] sm:$0x1]
    %v20 = vmul.f32 %v18, %v18
    %v21 = vld [vmem:[%s2] sm:$0xff]
    %v22 = vld [vmem:[%s2 + $0x8] sm:$0xff]
    %v23 = vld [vmem:[%s2 + $0x10] sm:$0xff]
    %v24 = vld [vmem:[%s2 + $0x18] sm:$0xff]
    %v25 = vld [vmem:[%s2 + $0x20] sm:$0xff]
    %v26 = vld [vmem:[%s2 + $0x28] sm:$0xff]
    %v27 = vld [vmem:[%s2 + $0x30] sm:$0xff]
    %v28 = vld [vmem:[%s2 + $0x38] sm:$0xff]
    %v29 = vld [vmem:[%s2 + $0x40] sm:$0xff]
    %vm30 = vcmask 588800
    %v32 = vsel %vm30, %v20, 0
    %34 = vmatpush.msra.mxu0 0.0
    %35 = vmatpush.msra.mxu0 0.0
    %36 = vmatpush.msra.mxu0 0.0
    %37 = vmatpush.msra.mxu0 0.0
    %38 = vmatpush.msra.mxu0 0.0
    %39 = vmatpush.msra.mxu0 0.0
    %40 = vmatpush.msra.mxu0 0.0
    %v41 = vand.u32 %v29, 4294901760
    %42 = vmatpush.msra.mxu0 %v41
    %v43 = vand.u32 %v28, 4294901760
    %44 = vmatpush.msra.mxu0 %v43
    %v45 = vand.u32 %v27, 4294901760
    %46 = vmatpush.msra.mxu0 %v45
    %v47 = vand.u32 %v26, 4294901760
    %48 = vmatpush.msra.mxu0 %v47
    %v49 = vand.u32 %v25, 4294901760
    %50 = vmatpush.msra.mxu0 %v49
    %v51 = vand.u32 %v24, 4294901760
    %52 = vmatpush.msra.mxu0 %v51
    %v53 = vand.u32 %v23, 4294901760
    %54 = vmatpush.msra.mxu0 %v53
    %v55 = vand.u32 %v22, 4294901760
    %56 = vmatpush.msra.mxu0 %v55
    %v57 = vand.u32 %v21, 4294901760
    %58 = vmatpush.msra.mxu0 %v57
    %v59 = vand.u32 %v32, 4294901760
    %v60 = vsub.f32 %v32, %v59
    %v61 = vand.u32 %v60, 4294901760
    %v62 = vsub.f32 %v60, %v61
    %v63 = vand.u32 %v62, 4294901760
    %64 = vmatmul.f32.gmra.mxu0 %v63
    %v65 = vpop.f32.mrf.mxu0
    %v66 = vadd.f32 0.0, %v65
    %67 = vdwg.mxu0
    %68 = vmatpush.msra.mxu0 0.0
    %69 = vmatpush.msra.mxu0 0.0
    %70 = vmatpush.msra.mxu0 0.0
    %71 = vmatpush.msra.mxu0 0.0
    %72 = vmatpush.msra.mxu0 0.0
    %73 = vmatpush.msra.mxu0 0.0
    %74 = vmatpush.msra.mxu0 0.0
    %v75 = vand.u32 %v29, 4294901760
    %v76 = vsub.f32 %v29, %v75
    %v77 = vand.u32 %v76, 4294901760
    %v78 = vsub.f32 %v76, %v77
    %v79 = vand.u32 %v78, 4294901760
    %80 = vmatpush.msra.mxu0 %v79
    %v81 = vand.u32 %v28, 4294901760
    %v82 = vsub.f32 %v28, %v81
    %v83 = vand.u32 %v82, 4294901760
    %v84 = vsub.f32 %v82, %v83
    %v85 = vand.u32 %v84, 4294901760
    %86 = vmatpush.msra.mxu0 %v85
    %v87 = vand.u32 %v27, 4294901760
    %v88 = vsub.f32 %v27, %v87
    %v89 = vand.u32 %v88, 4294901760
    %v90 = vsub.f32 %v88, %v89
    %v91 = vand.u32 %v90, 4294901760
    %92 = vmatpush.msra.mxu0 %v91
    %v93 = vand.u32 %v26, 4294901760
    %v94 = vsub.f32 %v26, %v93
    %v95 = vand.u32 %v94, 4294901760
    %v96 = vsub.f32 %v94, %v95
    %v97 = vand.u32 %v96, 4294901760
    %98 = vmatpush.msra.mxu0 %v97
    %v99 = vand.u32 %v25, 4294901760
    %v100 = vsub.f32 %v25, %v99
    %v101 = vand.u32 %v100, 4294901760
    %v102 = vsub.f32 %v100, %v101
    %v103 = vand.u32 %v102, 4294901760
    %104 = vmatpush.msra.mxu0 %v103
    %v105 = vand.u32 %v24, 4294901760
    %v106 = vsub.f32 %v24, %v105
    %v107 = vand.u32 %v106, 4294901760
    %v108 = vsub.f32 %v106, %v107
    %v109 = vand.u32 %v108, 4294901760
    %110 = vmatpush.msra.mxu0 %v109
    %v111 = vand.u32 %v23, 4294901760
    %v112 = vsub.f32 %v23, %v111
    %v113 = vand.u32 %v112, 4294901760
    %v114 = vsub.f32 %v112, %v113
    %v115 = vand.u32 %v114, 4294901760
    %116 = vmatpush.msra.mxu0 %v115
    %v117 = vand.u32 %v22, 4294901760
    %v118 = vsub.f32 %v22, %v117
    %v119 = vand.u32 %v118, 4294901760
    %v120 = vsub.f32 %v118, %v119
    %v121 = vand.u32 %v120, 4294901760
    %122 = vmatpush.msra.mxu0 %v121
    %v123 = vand.u32 %v21, 4294901760
    %v124 = vsub.f32 %v21, %v123
    %v125 = vand.u32 %v124, 4294901760
    %v126 = vsub.f32 %v124, %v125
    %v127 = vand.u32 %v126, 4294901760
    %128 = vmatpush.msra.mxu0 %v127
    %v129 = vand.u32 %v32, 4294901760
    %130 = vmatmul.f32.gmra.mxu0 %v129
    %v131 = vpop.f32.mrf.mxu0
    %v132 = vadd.f32 %v66, %v131
    %133 = vdwg.mxu0
    %134 = vmatpush.msra.mxu0 0.0
    %135 = vmatpush.msra.mxu0 0.0
    %136 = vmatpush.msra.mxu0 0.0
    %137 = vmatpush.msra.mxu0 0.0
    %138 = vmatpush.msra.mxu0 0.0
    %139 = vmatpush.msra.mxu0 0.0
    %140 = vmatpush.msra.mxu0 0.0
    %v141 = vand.u32 %v29, 4294901760
    %v142 = vsub.f32 %v29, %v141
    %143 = vmatpush.msra.mxu0 %v142
    %v144 = vand.u32 %v28, 4294901760
    %v145 = vsub.f32 %v28, %v144
    %146 = vmatpush.msra.mxu0 %v145
    %v147 = vand.u32 %v27, 4294901760
    %v148 = vsub.f32 %v27, %v147
    %149 = vmatpush.msra.mxu0 %v148
    %v150 = vand.u32 %v26, 4294901760
    %v151 = vsub.f32 %v26, %v150
    %152 = vmatpush.msra.mxu0 %v151
    %v153 = vand.u32 %v25, 4294901760
    %v154 = vsub.f32 %v25, %v153
    %155 = vmatpush.msra.mxu0 %v154
    %v156 = vand.u32 %v24, 4294901760
    %v157 = vsub.f32 %v24, %v156
    %158 = vmatpush.msra.mxu0 %v157
    %v159 = vand.u32 %v23, 4294901760
    %v160 = vsub.f32 %v23, %v159
    %161 = vmatpush.msra.mxu0 %v160
    %v162 = vand.u32 %v22, 4294901760
    %v163 = vsub.f32 %v22, %v162
    %164 = vmatpush.msra.mxu0 %v163
    %v165 = vand.u32 %v21, 4294901760
    %v166 = vsub.f32 %v21, %v165
    %167 = vmatpush.msra.mxu0 %v166
    %v168 = vand.u32 %v32, 4294901760
    %v169 = vsub.f32 %v32, %v168
    %170 = vmatmul.f32.gmra.mxu0 %v169
    %v171 = vpop.f32.mrf.mxu0
    %v172 = vadd.f32 %v132, %v171
    %173 = vdwg.mxu0
    %174 = vmatpush.msra.mxu0 0.0
    %175 = vmatpush.msra.mxu0 0.0
    %176 = vmatpush.msra.mxu0 0.0
    %177 = vmatpush.msra.mxu0 0.0
    %178 = vmatpush.msra.mxu0 0.0
    %179 = vmatpush.msra.mxu0 0.0
    %180 = vmatpush.msra.mxu0 0.0
    %v181 = vand.u32 %v29, 4294901760
    %182 = vmatpush.msra.mxu0 %v181
    %v183 = vand.u32 %v28, 4294901760
    %184 = vmatpush.msra.mxu0 %v183
    %v185 = vand.u32 %v27, 4294901760
    %186 = vmatpush.msra.mxu0 %v185
    %v187 = vand.u32 %v26, 4294901760
    %188 = vmatpush.msra.mxu0 %v187
    %v189 = vand.u32 %v25, 4294901760
    %190 = vmatpush.msra.mxu0 %v189
    %v191 = vand.u32 %v24, 4294901760
    %192 = vmatpush.msra.mxu0 %v191
    %v193 = vand.u32 %v23, 4294901760
    %194 = vmatpush.msra.mxu0 %v193
    %v195 = vand.u32 %v22, 4294901760
    %196 = vmatpush.msra.mxu0 %v195
    %v197 = vand.u32 %v21, 4294901760
    %198 = vmatpush.msra.mxu0 %v197
    %v199 = vand.u32 %v32, 4294901760
    %v200 = vsub.f32 %v32, %v199
    %v201 = vand.u32 %v200, 4294901760
    %202 = vmatmul.f32.gmra.mxu0 %v201
    %v203 = vpop.f32.mrf.mxu0
    %v204 = vadd.f32 %v172, %v203
    %205 = vdwg.mxu0
    %206 = vmatpush.msra.mxu0 0.0
    %207 = vmatpush.msra.mxu0 0.0
    %208 = vmatpush.msra.mxu0 0.0
    %209 = vmatpush.msra.mxu0 0.0
    %210 = vmatpush.msra.mxu0 0.0
    %211 = vmatpush.msra.mxu0 0.0
    %212 = vmatpush.msra.mxu0 0.0
    %v213 = vand.u32 %v29, 4294901760
    %v214 = vsub.f32 %v29, %v213
    %v215 = vand.u32 %v214, 4294901760
    %216 = vmatpush.msra.mxu0 %v215
    %v217 = vand.u32 %v28, 4294901760
    %v218 = vsub.f32 %v28, %v217
    %v219 = vand.u32 %v218, 4294901760
    %220 = vmatpush.msra.mxu0 %v219
    %v221 = vand.u32 %v27, 4294901760
    %v222 = vsub.f32 %v27, %v221
    %v223 = vand.u32 %v222, 4294901760
    %224 = vmatpush.msra.mxu0 %v223
    %v225 = vand.u32 %v26, 4294901760
    %v226 = vsub.f32 %v26, %v225
    %v227 = vand.u32 %v226, 4294901760
    %228 = vmatpush.msra.mxu0 %v227
    %v229 = vand.u32 %v25, 4294901760
    %v230 = vsub.f32 %v25, %v229
    %v231 = vand.u32 %v230, 4294901760
    %232 = vmatpush.msra.mxu0 %v231
    %v233 = vand.u32 %v24, 4294901760
    %v234 = vsub.f32 %v24, %v233
    %v235 = vand.u32 %v234, 4294901760
    %236 = vmatpush.msra.mxu0 %v235
    %v237 = vand.u32 %v23, 4294901760
    %v238 = vsub.f32 %v23, %v237
    %v239 = vand.u32 %v238, 4294901760
    %240 = vmatpush.msra.mxu0 %v239
    %v241 = vand.u32 %v22, 4294901760
    %v242 = vsub.f32 %v22, %v241
    %v243 = vand.u32 %v242, 4294901760
    %244 = vmatpush.msra.mxu0 %v243
    %v245 = vand.u32 %v21, 4294901760
    %v246 = vsub.f32 %v21, %v245
    %v247 = vand.u32 %v246, 4294901760
    %248 = vmatpush.msra.mxu0 %v247
    %v249 = vand.u32 %v32, 4294901760
    %250 = vmatmul.f32.gmra.mxu0 %v249
    %v251 = vpop.f32.mrf.mxu0
    %v252 = vadd.f32 %v204, %v251
    %253 = vdwg.mxu0
    %254 = vmatpush.msra.mxu0 0.0
    %255 = vmatpush.msra.mxu0 0.0
    %256 = vmatpush.msra.mxu0 0.0
    %257 = vmatpush.msra.mxu0 0.0
    %258 = vmatpush.msra.mxu0 0.0
    %259 = vmatpush.msra.mxu0 0.0
    %260 = vmatpush.msra.mxu0 0.0
    %v261 = vand.u32 %v29, 4294901760
    %262 = vmatpush.msra.mxu0 %v261
    %v263 = vand.u32 %v28, 4294901760
    %264 = vmatpush.msra.mxu0 %v263
    %v265 = vand.u32 %v27, 4294901760
    %266 = vmatpush.msra.mxu0 %v265
    %v267 = vand.u32 %v26, 4294901760
    %268 = vmatpush.msra.mxu0 %v267
    %v269 = vand.u32 %v25, 4294901760
    %270 = vmatpush.msra.mxu0 %v269
    %v271 = vand.u32 %v24, 4294901760
    %272 = vmatpush.msra.mxu0 %v271
    %v273 = vand.u32 %v23, 4294901760
    %274 = vmatpush.msra.mxu0 %v273
    %v275 = vand.u32 %v22, 4294901760
    %276 = vmatpush.msra.mxu0 %v275
    %v277 = vand.u32 %v21, 4294901760
    %278 = vmatpush.msra.mxu0 %v277
    %v279 = vand.u32 %v32, 4294901760
    %280 = vmatmul.f32.gmra.mxu0 %v279
    %v281 = vpop.f32.mrf.mxu0
    %v282 = vadd.f32 %v252, %v281
    %283 = vdwg.mxu0
    %v284 = vmul.f32 %v282, 0.11111111
    %v285 = vadd.f32 %v284, 1e-05
    %v286 = vrsqrt.pop %v285
    %v287 = vmul.f32 %v286, %v285
    %v288 = vmul.f32 %v287, %v286
    %v289 = vmul.f32 0.5, %v288
    %v290 = vsub.f32 1.5, %v289
    %v291 = vmul.f32 %v286, %v290
    %vm292 = vweird.f32 %v285
    %vm293 = vweird.f32 %v286
    %vm294 = vmor %vm292, %vm293
    %v295 = vsel %vm294, %v286, %v291
    %v296 = vld [vmem:[%s3] sm:$0xff]
    %vm297 = vcmask 64512
    %v299 = vsel %vm297, %v295, 0
    %301 = vmatpush.msra.mxu0 0.0
    %302 = vmatpush.msra.mxu0 0.0
    %303 = vmatpush.msra.mxu0 0.0
    %304 = vmatpush.msra.mxu0 0.0
    %305 = vmatpush.msra.mxu0 0.0
    %306 = vmatpush.msra.mxu0 0.0
    %307 = vmatpush.msra.mxu0 0.0
    %308 = vmatpush.msra.mxu0 0.0
    %309 = vmatpush.msra.mxu0 0.0
    %310 = vmatpush.msra.mxu0 0.0
    %311 = vmatpush.msra.mxu0 0.0
    %312 = vmatpush.msra.mxu0 0.0
    %313 = vmatpush.msra.mxu0 0.0
    %314 = vmatpush.msra.mxu0 0.0
    %315 = vmatpush.msra.mxu0 0.0
    %v316 = vand.u32 %v296, 4294901760
    %317 = vmatpush.msra.mxu0 %v316
    %v318 = vand.u32 %v299, 4294901760
    %v319 = vsub.f32 %v299, %v318
    %v320 = vand.u32 %v319, 4294901760
    %v321 = vsub.f32 %v319, %v320
    %v322 = vand.u32 %v321, 4294901760
    %323 = vmatmul.f32.gmra.mxu0 %v322
    %v324 = vpop.f32.mrf.mxu0
    %v325 = vadd.f32 0.0, %v324
    %326 = vdwg.mxu0
    %327 = vmatpush.msra.mxu0 0.0
    %328 = vmatpush.msra.mxu0 0.0
    %329 = vmatpush.msra.mxu0 0.0
    %330 = vmatpush.msra.mxu0 0.0
    %331 = vmatpush.msra.mxu0 0.0
    %332 = vmatpush.msra.mxu0 0.0
    %333 = vmatpush.msra.mxu0 0.0
    %334 = vmatpush.msra.mxu0 0.0
    %335 = vmatpush.msra.mxu0 0.0
    %336 = vmatpush.msra.mxu0 0.0
    %337 = vmatpush.msra.mxu0 0.0
    %338 = vmatpush.msra.mxu0 0.0
    %339 = vmatpush.msra.mxu0 0.0
    %340 = vmatpush.msra.mxu0 0.0
    %341 = vmatpush.msra.mxu0 0.0
    %v342 = vand.u32 %v296, 4294901760
    %v343 = vsub.f32 %v296, %v342
    %v344 = vand.u32 %v343, 4294901760
    %v345 = vsub.f32 %v343, %v344
    %v346 = vand.u32 %v345, 4294901760
    %347 = vmatpush.msra.mxu0 %v346
    %v348 = vand.u32 %v299, 4294901760
    %349 = vmatmul.f32.gmra.mxu0 %v348
    %v350 = vpop.f32.mrf.mxu0
    %v351 = vadd.f32 %v325, %v350
    %352 = vdwg.mxu0
    %353 = vmatpush.msra.mxu0 0.0
    %354 = vmatpush.msra.mxu0 0.0
    %355 = vmatpush.msra.mxu0 0.0
    %356 = vmatpush.msra.mxu0 0.0
    %357 = vmatpush.msra.mxu0 0.0
    %358 = vmatpush.msra.mxu0 0.0
    %359 = vmatpush.msra.mxu0 0.0
    %360 = vmatpush.msra.mxu0 0.0
    %361 = vmatpush.msra.mxu0 0.0
    %362 = vmatpush.msra.mxu0 0.0
    %363 = vmatpush.msra.mxu0 0.0
    %364 = vmatpush.msra.mxu0 0.0
    %365 = vmatpush.msra.mxu0 0.0
    %366 = vmatpush.msra.mxu0 0.0
    %367 = vmatpush.msra.mxu0 0.0
    %v368 = vand.u32 %v296, 4294901760
    %v369 = vsub.f32 %v296, %v368
    %370 = vmatpush.msra.mxu0 %v369
    %v371 = vand.u32 %v299, 4294901760
    %v372 = vsub.f32 %v299, %v371
    %373 = vmatmul.f32.gmra.mxu0 %v372
    %v374 = vpop.f32.mrf.mxu0
    %v375 = vadd.f32 %v351, %v374
    %376 = vdwg.mxu0
    %377 = vmatpush.msra.mxu0 0.0
    %378 = vmatpush.msra.mxu0 0.0
    %379 = vmatpush.msra.mxu0 0.0
    %380 = vmatpush.msra.mxu0 0.0
    %381 = vmatpush.msra.mxu0 0.0
    %382 = vmatpush.msra.mxu0 0.0
    %383 = vmatpush.msra.mxu0 0.0
    %384 = vmatpush.msra.mxu0 0.0
    %385 = vmatpush.msra.mxu0 0.0
    %386 = vmatpush.msra.mxu0 0.0
    %387 = vmatpush.msra.mxu0 0.0
    %388 = vmatpush.msra.mxu0 0.0
    %389 = vmatpush.msra.mxu0 0.0
    %390 = vmatpush.msra.mxu0 0.0
    %391 = vmatpush.msra.mxu0 0.0
    %v392 = vand.u32 %v296, 4294901760
    %393 = vmatpush.msra.mxu0 %v392
    %v394 = vand.u32 %v299, 4294901760
    %v395 = vsub.f32 %v299, %v394
    %v396 = vand.u32 %v395, 4294901760
    %397 = vmatmul.f32.gmra.mxu0 %v396
    %v398 = vpop.f32.mrf.mxu0
    %v399 = vadd.f32 %v375, %v398
    %400 = vdwg.mxu0
    %401 = vmatpush.msra.mxu0 0.0
    %402 = vmatpush.msra.mxu0 0.0
    %403 = vmatpush.msra.mxu0 0.0
    %404 = vmatpush.msra.mxu0 0.0
    %405 = vmatpush.msra.mxu0 0.0
    %406 = vmatpush.msra.mxu0 0.0
    %407 = vmatpush.msra.mxu0 0.0
    %408 = vmatpush.msra.mxu0 0.0
    %409 = vmatpush.msra.mxu0 0.0
    %410 = vmatpush.msra.mxu0 0.0
    %411 = vmatpush.msra.mxu0 0.0
    %412 = vmatpush.msra.mxu0 0.0
    %413 = vmatpush.msra.mxu0 0.0
    %414 = vmatpush.msra.mxu0 0.0
    %415 = vmatpush.msra.mxu0 0.0
    %v416 = vand.u32 %v296, 4294901760
    %v417 = vsub.f32 %v296, %v416
    %v418 = vand.u32 %v417, 4294901760
    %419 = vmatpush.msra.mxu0 %v418
    %v420 = vand.u32 %v299, 4294901760
    %421 = vmatmul.f32.gmra.mxu0 %v420
    %v422 = vpop.f32.mrf.mxu0
    %v423 = vadd.f32 %v399, %v422
    %424 = vdwg.mxu0
    %425 = vmatpush.msra.mxu0 0.0
    %426 = vmatpush.msra.mxu0 0.0
    %427 = vmatpush.msra.mxu0 0.0
    %428 = vmatpush.msra.mxu0 0.0
    %429 = vmatpush.msra.mxu0 0.0
    %430 = vmatpush.msra.mxu0 0.0
    %431 = vmatpush.msra.mxu0 0.0
    %432 = vmatpush.msra.mxu0 0.0
    %433 = vmatpush.msra.mxu0 0.0
    %434 = vmatpush.msra.mxu0 0.0
    %435 = vmatpush.msra.mxu0 0.0
    %436 = vmatpush.msra.mxu0 0.0
    %437 = vmatpush.msra.mxu0 0.0
    %438 = vmatpush.msra.mxu0 0.0
    %439 = vmatpush.msra.mxu0 0.0
    %v440 = vand.u32 %v296, 4294901760
    %441 = vmatpush.msra.mxu0 %v440
    %v442 = vand.u32 %v299, 4294901760
    %443 = vmatmul.f32.gmra.mxu0 %v442
    %v444 = vpop.f32.mrf.mxu0
    %v445 = vadd.f32 %v423, %v444
    %446 = vdwg.mxu0
    %v447 = vmul.f32 %v18, %v445
    %v449 = vperm.slane %v19, 0
    %v451 = vmul.f32 %v447, %v449
    %452 = vst.msk [vmem:[#allocation2] sm:$0xff] %vm30, %v451
    // Predicated region
    $region18: #{tpu_custom_call.1} parent=1 // pred_check
      _
    $region19: #{tpu_custom_call.1} parent=1 // pred_check_branch
      %454 = sbr.rel (0) target = $region21
    $region20: #{tpu_custom_call.1} parent=1 // pred_region
      %456 = vsyncadd [#allocation3], 96
      %s457 = sshll.u32 [#allocation2], 4
      %s458 = int_to_ptr.vmem [resolvable:$true] %s457
      %s459 = sshll.u32 %s4, 4
      %s460 = int_to_ptr.hbm [resolvable:$true] %s459
      %465 = dma.vmem_to_hbm [thread:$0]  %s458, 32, %s460, [#allocation3], 32, 32, 2
    $region21: #{tpu_custom_call.1} parent=1 // pred_fallthru
      _
    // Predicated region
    $region22: #{tpu_custom_call.1} parent=1 // pred_check
      _
    $region23: #{tpu_custom_call.1} parent=1 // pred_check_branch
      %467 = sbr.rel (0) target = $region25
    $region24: #{tpu_custom_call.1} parent=1 // pred_region
      %469 = dma.done [#allocation3], 128
    $region25: #{tpu_custom_call.1} parent=1 // pred_fallthru
      _
    %470 = vsyncpa [#allocation3], 1

</llo_original>
